<compile_context>
chip_gen: v7x
topology: tpu7x:2x2x1
jax: 0.10.0
libtpu: 0.0.40
codegen_flags: <defaults>
</compile_context>

<pallas_src>
import math

import jax
import jax.numpy as jnp
from jax.experimental import pallas as pl
from jax.experimental.pallas import tpu as pltpu


def _round_up(x, m):
    return (x + m - 1) // m * m


def _vmem_budget_bytes():
    """Per-TensorCore VMEM budget with headroom for compiler-internal scratch."""
    cap = 64 * 1024 * 1024
    try:
        info = pltpu.get_tpu_info()
        cap = int(getattr(info, "vmem_capacity_bytes", cap) or cap)
    except Exception:
        pass
    # Leave ~12.5% headroom for Mosaic internal scratch / semaphores; never
    # ask for more than 100 MiB even on 128 MiB parts (v5e / v6e).
    return min(cap * 7 // 8, 100 * 1024 * 1024)


def _pick_tm(M, tm_max):
    """Token-tile rows: big (weight-stream arithmetic intensity ~ tm flops/B),
    bounded padding waste, and >= 2 tiles when M > tm_max (v7x megacore)."""
    tm_max = max(128, min(tm_max, 1024))
    if M <= tm_max:
        return max(8, _round_up(M, 8))          # single tile, no wasted rows
    for c in (1024, 512, 256, 128):
        if c <= tm_max and (_round_up(M, c) - M) * 8 <= M:   # <=12.5% padding
            return c
    return 128


def _pick_tf(Fp, tf_target):
    """Largest multiple of 128 <= tf_target that divides the padded d_ff."""
    tf_target = max(128, min((tf_target // 128) * 128, Fp))
    for cand in range(tf_target, 127, -128):
        if Fp % cand == 0:
            return cand
    return 128


def prepare_ffn_params(w1, b1, w2, b2, *, compute_dtype=jnp.bfloat16):
    """Pad + cast the static FFN parameters ONCE (outside the per-call hot path).

    w1: [D, d_ff], b1: [d_ff], w2: [d_ff, D], b2: [D]
    (pre-transposed relative to PyTorch nn.Linear's (out_features, in_features)).
    """
    D, d_ff = w1.shape
    Dp = _round_up(D, 128)        # lane-dense output last dim
    Fp = _round_up(d_ff, 128)

    def pad2(a, rows, cols):
        if a.shape == (rows, cols):
            return a
        return jnp.pad(a, ((0, rows - a.shape[0]), (0, cols - a.shape[1])))

    def pad1(a, cols):
        return a if a.shape[0] == cols else jnp.pad(a, (0, cols - a.shape[0]))

    # Zero padding keeps semantics exact: padded hidden columns see zero
    # weights and zero bias, padded output columns/rows are sliced away.
    w1p = pad2(w1, Dp, Fp).astype(compute_dtype)
    w2p = pad2(w2, Fp, Dp).astype(compute_dtype)
    b1p = pad1(b1, Fp).astype(jnp.float32).reshape(1, Fp)
    b2p = pad1(b2, Dp).astype(jnp.float32).reshape(1, Dp)
    return (w1p, b1p, w2p, b2p, D, d_ff)


def position_wise_ffnn(x, params, *, tm_max=512, tf=512, force_weight_tiling=False):
    """Position-wise FFN forward.  x: [..., D], params from prepare_ffn_params.

    tm_max: raise to 768-1024 on v6e if VMEM allows (weight-stream roofline).
    """
    w1p, b1p, w2p, b2p, D, d_ff = params
    Dp, Fp = w1p.shape
    compute_dtype = w1p.dtype
    out_dtype = x.dtype

    orig_shape = x.shape
    assert orig_shape[-1] == D, f"expected last dim {D}, got {orig_shape[-1]}"
    M = math.prod(orig_shape[:-1]) if len(orig_shape) > 1 else 1

    tm = _pick_tm(M, tm_max)
    Mp = _round_up(M, tm)

    x2 = x.reshape(M, D)
    if (Mp, Dp) != (M, D):
        x2 = jnp.pad(x2, ((0, Mp - M), (0, Dp - D)))
    # NOTE: x stays in its original dtype; the kernel casts to bf16 after the
    # tile is loaded, avoiding a separate wrapper-side HBM cast pass.

    vmem_budget = _vmem_budget_bytes()
    xb = jnp.dtype(x2.dtype).itemsize
    ob = jnp.dtype(out_dtype).itemsize
    wb = jnp.dtype(compute_dtype).itemsize

    # ---------------------------------------------------------------- path A:
    # whole W1/W2 VMEM-resident, single (token) grid axis, weights DMA'd once.
    resident_bytes = (
        2 * tm * Dp * xb            # double-buffered x tiles
        + 2 * tm * Dp * ob          # double-buffered out tiles
        + 2 * 2 * Dp * Fp * wb      # W1 + W2 (conservatively count 2 buffers)
        + 2 * 4 * (Fp + Dp)         # biases
        + tm * Fp * 4               # (tm, Fp) f32 intermediate h
    )
    use_resident = (not force_weight_tiling) and (
        resident_bytes <= vmem_budget - (2 << 20))

    if use_resident:
        def kernel_resident(x_ref, w1_ref, b1_ref, w2_ref, b2_ref, o_ref):
            xa = x_ref[...].astype(compute_dtype)
            h = jnp.dot(xa, w1_ref[...], preferred_element_type=jnp.float32)
            h = jnp.maximum(h + b1_ref[...], 0.0)          # bias + ReLU in f32
            y = jnp.dot(h.astype(compute_dtype), w2_ref[...],
                        preferred_element_type=jnp.float32)
            o_ref[...] = (y + b2_ref[...]).astype(o_ref.dtype)

        out2 = pl.pallas_call(
            kernel_resident,
            out_shape=jax.ShapeDtypeStruct((Mp, Dp), out_dtype),
            grid_spec=pltpu.PrefetchScalarGridSpec(
                num_scalar_prefetch=0,
                grid=(Mp // tm,),
                in_specs=[
                    pl.BlockSpec((tm, Dp), lambda i: (i, 0)),   # x tile
                    pl.BlockSpec((Dp, Fp), lambda i: (0, 0)),   # W1 (fetched once)
                    pl.BlockSpec((1, Fp), lambda i: (0, 0)),    # b1
                    pl.BlockSpec((Fp, Dp), lambda i: (0, 0)),   # W2 (fetched once)
                    pl.BlockSpec((1, Dp), lambda i: (0, 0)),    # b2
                ],
                out_specs=pl.BlockSpec((tm, Dp), lambda i: (i, 0)),
            ),
            compiler_params=pltpu.CompilerParams(
                dimension_semantics=("parallel",),
                vmem_limit_bytes=int(vmem_budget),
            ),
        )(x2, w1p, b1p, w2p, b2p)
        return out2[:M, :D].reshape(orig_shape)

    # ---------------------------------------------------------------- path B:
    # d_ff tiled as a trailing reduction axis; output block stays resident.
    tf_eff = _pick_tf(Fp, tf)
    grid = (Mp // tm, Fp // tf_eff)
    f32_out = jnp.dtype(out_dtype) == jnp.dtype(jnp.float32)

    def _partial(x_ref, w1_ref, b1_ref, w2_ref):
        xa = x_ref[...].astype(compute_dtype)
        h = jnp.maximum(
            jnp.dot(xa, w1_ref[...], preferred_element_type=jnp.float32)
            + b1_ref[...], 0.0)
        return jnp.dot(h.astype(compute_dtype), w2_ref[...],
                       preferred_element_type=jnp.float32)

    if f32_out:
        # Accumulate directly into the resident f32 output block (no scratch).
        def kernel_tiled(x_ref, w1_ref, b1_ref, w2_ref, b2_ref, o_ref):
            f = pl.program_id(1)
            contrib = _partial(x_ref, w1_ref, b1_ref, w2_ref)

            @pl.when(f == 0)
            def _():
                o_ref[...] = contrib + b2_ref[...]

            @pl.when(f != 0)
            def _():
                o_ref[...] += contrib

        scratch_shapes = []
    else:
        def kernel_tiled(x_ref, w1_ref, b1_ref, w2_ref, b2_ref, o_ref, acc_ref):
            f = pl.program_id(1)
            contrib = _partial(x_ref, w1_ref, b1_ref, w2_ref)

            @pl.when(f == 0)
            def _():
                acc_ref[...] = contrib

            @pl.when(f != 0)
            def _():
                acc_ref[...] += contrib

            @pl.when(f == pl.num_programs(1) - 1)
            def _():
                o_ref[...] = (acc_ref[...] + b2_ref[...]).astype(o_ref.dtype)

        scratch_shapes = [pltpu.VMEM((tm, Dp), jnp.float32)]

    # TODO(synk): on v5e, if xprof shows exposed DMA on the W1/W2 streams,
    # add pipeline_mode=pl.Buffered(3) to the two weight BlockSpecs.
    out2 = pl.pallas_call(
        kernel_tiled,
        out_shape=jax.ShapeDtypeStruct((Mp, Dp), out_dtype),
        grid_spec=pltpu.PrefetchScalarGridSpec(
            num_scalar_prefetch=0,
            grid=grid,
            in_specs=[
                pl.BlockSpec((tm, Dp), lambda i, f: (i, 0)),       # x tile
                pl.BlockSpec((Dp, tf_eff), lambda i, f: (0, f)),   # W1 tile
                pl.BlockSpec((1, tf_eff), lambda i, f: (0, f)),    # b1 tile
                pl.BlockSpec((tf_eff, Dp), lambda i, f: (f, 0)),   # W2 tile
                pl.BlockSpec((1, Dp), lambda i, f: (0, 0)),        # b2
            ],
            out_specs=pl.BlockSpec((tm, Dp), lambda i, f: (i, 0)),
            scratch_shapes=scratch_shapes,
        ),
        compiler_params=pltpu.CompilerParams(
            dimension_semantics=("parallel", "arbitrary"),
            vmem_limit_bytes=int(vmem_budget),
        ),
    )(x2, w1p, b1p, w2p, b2p)
    return out2[:M, :D].reshape(orig_shape)


def init_params(key, embed_d, d_ff, dtype=jnp.float32):
    """Mirror nn.Linear default init: U(-1/sqrt(fan_in), 1/sqrt(fan_in))."""
    k1, k2, k3, k4 = jax.random.split(key, 4)
    lim1 = 1.0 / (embed_d ** 0.5)
    lim2 = 1.0 / (d_ff ** 0.5)
    # Stored pre-transposed relative to PyTorch's (out_features, in_features).
    w1 = jax.random.uniform(k1, (embed_d, d_ff), dtype, -lim1, lim1)
    b1 = jax.random.uniform(k2, (d_ff,), dtype, -lim1, lim1)
    w2 = jax.random.uniform(k3, (d_ff, embed_d), dtype, -lim2, lim2)
    b2 = jax.random.uniform(k4, (embed_d,), dtype, -lim2, lim2)
    return w1, b1, w2, b2


def _reference(x, w1, b1, w2, b2):
    return jnp.maximum(x @ w1 + b1, 0.0) @ w2 + b2


if __name__ == "__main__":
    key = jax.random.PRNGKey(0)
    kx, kp, kx2 = jax.random.split(key, 3)

    B, S, embed_d, d_ff = 2, 8, 32, 64
    x = jax.random.normal(kx, (B, S, embed_d), jnp.float32)
    w1, b1, w2, b2 = init_params(kp, embed_d, d_ff)

    # Pad / cast static weights once, outside the hot path.
    params = prepare_ffn_params(w1, b1, w2, b2)

    # Path A: weight-resident single-axis grid.
    out = jax.block_until_ready(position_wise_ffnn(x, params))
    ref = _reference(x, w1, b1, w2, b2)
    assert out.shape == (B, S, embed_d)
    # bf16 matmul inputs with f32 accumulation -> loosened tolerance.
    assert jnp.allclose(out, ref, atol=3e-2, rtol=3e-2), (
        float(jnp.max(jnp.abs(out - ref))))

    # Path B: forced d_ff-tiled fallback + ragged token count (M = 10).
    x_odd = jax.random.normal(kx2, (2, 5, embed_d), jnp.float32)
    out_odd = jax.block_until_ready(
        position_wise_ffnn(x_odd, params, force_weight_tiling=True))
    ref_odd = _reference(x_odd, w1, b1, w2, b2)
    assert out_odd.shape == (2, 5, embed_d)
    assert jnp.allclose(out_odd, ref_odd, atol=3e-2, rtol=3e-2), (
        float(jnp.max(jnp.abs(out_odd - ref_odd))))

    print("KERNEL_OK")
</pallas_src>

<mosaic_0001>
module attributes {stable_mosaic.version = 11 : i64} {
  func.func @kernel_resident(%arg0: i32, %arg1: memref<16x128xf32, #tpu.memory_space<vmem>>, %arg2: memref<128x128xbf16, #tpu.memory_space<vmem>>, %arg3: memref<1x128xf32, #tpu.memory_space<vmem>>, %arg4: memref<128x128xbf16, #tpu.memory_space<vmem>>, %arg5: memref<1x128xf32, #tpu.memory_space<vmem>>, %arg6: memref<16x128xf32, #tpu.memory_space<vmem>>) attributes {dimension_semantics = [#tpu.dimension_semantics<parallel>], iteration_bounds = array<i64: 1>, scalar_prefetch = 0 : i64, scratch_operands = 0 : i64, tpu.core_type = #tpu.core_type<tc>, window_params = [{transform_indices = @transform_0, window_bounds = array<i64: 16, 128>}, {pipeline_mode = #tpu.pipeline_mode<synchronous>, transform_indices = @transform_1, window_bounds = array<i64: 128, 128>}, {pipeline_mode = #tpu.pipeline_mode<synchronous>, transform_indices = @transform_2, window_bounds = array<i64: 1, 128>}, {pipeline_mode = #tpu.pipeline_mode<synchronous>, transform_indices = @transform_3, window_bounds = array<i64: 128, 128>}, {pipeline_mode = #tpu.pipeline_mode<synchronous>, transform_indices = @transform_4, window_bounds = array<i64: 1, 128>}, {transform_indices = @transform_5, window_bounds = array<i64: 16, 128>}]} {
    %c0 = arith.constant 0 : index
    %c0_0 = arith.constant 0 : index
    %0 = vector.load %arg1[%c0, %c0_0] : memref<16x128xf32, #tpu.memory_space<vmem>>, vector<16x128xf32>
    %1 = arith.truncf %0 : vector<16x128xf32> to vector<16x128xbf16>
    %c0_1 = arith.constant 0 : index
    %c0_2 = arith.constant 0 : index
    %2 = vector.load %arg2[%c0_1, %c0_2] : memref<128x128xbf16, #tpu.memory_space<vmem>>, vector<128x128xbf16>
    %cst = arith.constant dense<0.000000e+00> : vector<16x128xf32>
    %3 = tpu.matmul %1, %2, %cst {dimension_numbers = #tpu.dot_dimension_numbers<[1], [0], [0], [1], [0, 0, 1, 1], [], []>} : vector<16x128xbf16>, vector<128x128xbf16>, vector<16x128xf32> -> vector<16x128xf32>
    %c0_3 = arith.constant 0 : index
    %c0_4 = arith.constant 0 : index
    %4 = vector.load %arg3[%c0_3, %c0_4] : memref<1x128xf32, #tpu.memory_space<vmem>>, vector<1x128xf32>
    %5 = vector.broadcast %4 : vector<1x128xf32> to vector<16x128xf32>
    %6 = arith.addf %3, %5 : vector<16x128xf32>
    %cst_5 = arith.constant 0.000000e+00 : f32
    %7 = vector.broadcast %cst_5 : f32 to vector<16x128xf32>
    %8 = arith.maximumf %6, %7 : vector<16x128xf32>
    %9 = arith.truncf %8 : vector<16x128xf32> to vector<16x128xbf16>
    %c0_6 = arith.constant 0 : index
    %c0_7 = arith.constant 0 : index
    %10 = vector.load %arg4[%c0_6, %c0_7] : memref<128x128xbf16, #tpu.memory_space<vmem>>, vector<128x128xbf16>
    %cst_8 = arith.constant dense<0.000000e+00> : vector<16x128xf32>
    %11 = tpu.matmul %9, %10, %cst_8 {dimension_numbers = #tpu.dot_dimension_numbers<[1], [0], [0], [1], [0, 0, 1, 1], [], []>} : vector<16x128xbf16>, vector<128x128xbf16>, vector<16x128xf32> -> vector<16x128xf32>
    %c0_9 = arith.constant 0 : index
    %c0_10 = arith.constant 0 : index
    %12 = vector.load %arg5[%c0_9, %c0_10] : memref<1x128xf32, #tpu.memory_space<vmem>>, vector<1x128xf32>
    %13 = vector.broadcast %12 : vector<1x128xf32> to vector<16x128xf32>
    %14 = arith.addf %11, %13 : vector<16x128xf32>
    %c0_11 = arith.constant 0 : index
    %c0_12 = arith.constant 0 : index
    %15 = vector.load %arg6[%c0_11, %c0_12] : memref<16x128xf32, #tpu.memory_space<vmem>>, vector<16x128xf32>
    tpu.vector_store %arg6[%c0_11, %c0_12], %14 {strides = array<i32>} : memref<16x128xf32, #tpu.memory_space<vmem>>, vector<16x128xf32>,
    return
  }
  func.func @transform_0(%arg0: i32) -> (i32, i32) {
    %c0_i32 = arith.constant 0 : i32
    %c0_i32_0 = arith.constant 0 : i32
    return %arg0, %c0_i32 : i32, i32
  }
  func.func @transform_1(%arg0: i32) -> (i32, i32) {
    %c0_i32 = arith.constant 0 : i32
    %c0_i32_0 = arith.constant 0 : i32
    %c0_i32_1 = arith.constant 0 : i32
    return %c0_i32, %c0_i32_0 : i32, i32
  }
  func.func @transform_2(%arg0: i32) -> (i32, i32) {
    %c0_i32 = arith.constant 0 : i32
    %c0_i32_0 = arith.constant 0 : i32
    %c0_i32_1 = arith.constant 0 : i32
    return %c0_i32, %c0_i32_0 : i32, i32
  }
  func.func @transform_3(%arg0: i32) -> (i32, i32) {
    %c0_i32 = arith.constant 0 : i32
    %c0_i32_0 = arith.constant 0 : i32
    %c0_i32_1 = arith.constant 0 : i32
    return %c0_i32, %c0_i32_0 : i32, i32
  }
  func.func @transform_4(%arg0: i32) -> (i32, i32) {
    %c0_i32 = arith.constant 0 : i32
    %c0_i32_0 = arith.constant 0 : i32
    %c0_i32_1 = arith.constant 0 : i32
    return %c0_i32, %c0_i32_0 : i32, i32
  }
  func.func @transform_5(%arg0: i32) -> (i32, i32) {
    %c0_i32 = arith.constant 0 : i32
    %c0_i32_0 = arith.constant 0 : i32
    return %arg0, %c0_i32 : i32, i32
  }
}

</mosaic_0001>

<llo_original>
// kernel: tpu_custom_call.1
$region0: #{tpu_custom_call.1}
  #allocation0 [shape = 'u32[]', space=smem, size = 0x4, offset = 0x4, fixed_abs, tag = 'smem constant byte address 0x4 - core index']
  #allocation1 [shape = 'u32[144,128]{1,0:T(1,128)}', space=vmem, size = 0x12000, scoped, tag = 'internal scratch']
  %s0 = inlined_call_operand.hbm [shape: f32[16,128], index: 0, kind: input, shape index: {}]
  %s1 = inlined_call_operand.hbm [shape: bf16[128,128], index: 1, kind: input, shape index: {}]
  %s2 = inlined_call_operand.vmem [shape: f32[1,128], index: 2, kind: input, shape index: {}]
  %s3 = inlined_call_operand.hbm [shape: bf16[128,128], index: 3, kind: input, shape index: {}]
  %s4 = inlined_call_operand.vmem [shape: f32[1,128], index: 4, kind: input, shape index: {}]
  %s5 = inlined_call_operand.hbm [shape: f32[16,128], index: 5, kind: output, shape index: {}]
  %s6 = sld [smem:[#allocation0]]
  $region42: #{tpu_custom_call.1} parent=0
    _
  %s8 = ssub.s32 1, %s6
  %s9 = scalar_select 0, %s8, %s6
  $region1: #{tpu_custom_call.1} parent=0
    #allocation2 [shape = 'u8[8192]{0}', space=vmem, size = 0x2000, scoped, tag = 'input window, operand 0, single buffered']
    #allocation3 [shape = 's32[1]{0}', space=sflag, size = 0x4, scoped, tag = 'scoped memory for tpu_custom_call.1']
    #allocation4 [shape = 's32[1]{0}', space=sflag, size = 0x4, scoped, tag = 'scoped memory for tpu_custom_call.1']
    #allocation5 [shape = 'u8[32768]{0}', space=vmem, size = 0x8000, scoped, tag = 'input window, operand 1, single buffered']
    #allocation6 [shape = 's32[1]{0}', space=sflag, size = 0x4, scoped, tag = 'scoped memory for tpu_custom_call.1']
    #allocation7 [shape = 'u8[32768]{0}', space=vmem, size = 0x8000, scoped, tag = 'input window, operand 3, single buffered']
    #allocation8 [shape = 'u8[8192]{0}', space=vmem, size = 0x2000, scoped, tag = 'output window, operand 0, single buffered']
    %10 = vsyncpa [#allocation3], 0
    %11 = vsyncpa [#allocation6], 0
    %12 = vsyncpa [#allocation4], 0
    // Predicated region
    $region2: #{tpu_custom_call.1} parent=1 // pred_check
      _
    $region3: #{tpu_custom_call.1} parent=1 // pred_check_branch
      %14 = sbr.rel (0) target = $region5
    $region4: #{tpu_custom_call.1} parent=1 // pred_region
      %s16 = ssub.s32 256, 256
      %17 = vsyncadd [#allocation3], %s16
      %s18 = sshll.u32 [#allocation2], 4
      %s19 = int_to_ptr.vmem [resolvable:$true] %s18
      %24 = dma.hbm_to_vmem [thread:$0]  %s0, 256, %s19, [#allocation3], 128, 128, 8
    $region5: #{tpu_custom_call.1} parent=1 // pred_fallthru
      _
    // Predicated region
    $region6: #{tpu_custom_call.1} parent=1 // pred_check
      _
    $region7: #{tpu_custom_call.1} parent=1 // pred_check_branch
      %26 = sbr.rel (0) target = $region9
    $region8: #{tpu_custom_call.1} parent=1 // pred_region
      %s28 = ssub.s32 1024, 1024
      %29 = vsyncadd [#allocation6], %s28
      %s30 = sshll.u32 [#allocation5], 4
      %s31 = int_to_ptr.vmem [resolvable:$true] %s30
      %36 = dma.hbm_to_vmem [thread:$0]  %s1, 1024, %s31, [#allocation6], 64, 64, 4
    $region9: #{tpu_custom_call.1} parent=1 // pred_fallthru
      _
    // Predicated region
    $region10: #{tpu_custom_call.1} parent=1 // pred_check
      _
    $region11: #{tpu_custom_call.1} parent=1 // pred_check_branch
      %38 = sbr.rel (0) target = $region13
    $region12: #{tpu_custom_call.1} parent=1 // pred_region
      _
    $region13: #{tpu_custom_call.1} parent=1 // pred_fallthru
      _
    // Predicated region
    $region14: #{tpu_custom_call.1} parent=1 // pred_check
      _
    $region15: #{tpu_custom_call.1} parent=1 // pred_check_branch
      %40 = sbr.rel (0) target = $region17
    $region16: #{tpu_custom_call.1} parent=1 // pred_region
      %s42 = ssub.s32 1024, 1024
      %43 = vsyncadd [#allocation6], %s42
      %s44 = sshll.u32 [#allocation7], 4
      %s45 = int_to_ptr.vmem [resolvable:$true] %s44
      %50 = dma.hbm_to_vmem [thread:$0]  %s3, 1024, %s45, [#allocation6], 64, 64, 4
    $region17: #{tpu_custom_call.1} parent=1 // pred_fallthru
      _
    // Predicated region
    $region18: #{tpu_custom_call.1} parent=1 // pred_check
      _
    $region19: #{tpu_custom_call.1} parent=1 // pred_check_branch
      %52 = sbr.rel (0) target = $region21
    $region20: #{tpu_custom_call.1} parent=1 // pred_region
      _
    $region21: #{tpu_custom_call.1} parent=1 // pred_fallthru
      _
    // Predicated region
    $region22: #{tpu_custom_call.1} parent=1 // pred_check
      _
    $region23: #{tpu_custom_call.1} parent=1 // pred_check_branch
      %54 = sbr.rel (0) target = $region25
    $region24: #{tpu_custom_call.1} parent=1 // pred_region
      %55 = dma.done [#allocation3], 256
    $region25: #{tpu_custom_call.1} parent=1 // pred_fallthru
      _
    // Predicated region
    $region26: #{tpu_custom_call.1} parent=1 // pred_check
      _
    $region27: #{tpu_custom_call.1} parent=1 // pred_check_branch
      %57 = sbr.rel (0) target = $region29
    $region28: #{tpu_custom_call.1} parent=1 // pred_region
      %58 = dma.done [#allocation6], 1024
    $region29: #{tpu_custom_call.1} parent=1 // pred_fallthru
      _
    // Predicated region
    $region30: #{tpu_custom_call.1} parent=1 // pred_check
      _
    $region31: #{tpu_custom_call.1} parent=1 // pred_check_branch
      %60 = sbr.rel (0) target = $region33
    $region32: #{tpu_custom_call.1} parent=1 // pred_region
      %61 = dma.done [#allocation6], 1024
    $region33: #{tpu_custom_call.1} parent=1 // pred_fallthru
      _
    %v63 = vld [vmem:[#allocation2] sm:$0xff]
    %v64 = vld [vmem:[#allocation2 + $0x8] sm:$0xff]
    %v65 = vpack.c.bf16 %v64, %v63
    %v66 = vld [vmem:[#allocation5] sm:$0xf]
    %v67 = vld [vmem:[#allocation5 + $0x4] sm:$0xf]
    %v68 = vld [vmem:[#allocation5 + $0x8] sm:$0xf]
    %v69 = vld [vmem:[#allocation5 + $0xc] sm:$0xf]
    %v70 = vld [vmem:[#allocation5 + $0x10] sm:$0xf]
    %v71 = vld [vmem:[#allocation5 + $0x14] sm:$0xf]
    %v72 = vld [vmem:[#allocation5 + $0x18] sm:$0xf]
    %v73 = vld [vmem:[#allocation5 + $0x1c] sm:$0xf]
    %v74 = vld [vmem:[#allocation5 + $0x20] sm:$0xf]
    %v75 = vld [vmem:[#allocation5 + $0x24] sm:$0xf]
    %v76 = vld [vmem:[#allocation5 + $0x28] sm:$0xf]
    %v77 = vld [vmem:[#allocation5 + $0x2c] sm:$0xf]
    %v78 = vld [vmem:[#allocation5 + $0x30] sm:$0xf]
    %v79 = vld [vmem:[#allocation5 + $0x34] sm:$0xf]
    %v80 = vld [vmem:[#allocation5 + $0x38] sm:$0xf]
    %v81 = vld [vmem:[#allocation5 + $0x3c] sm:$0xf]
    %v82 = vld [vmem:[%s2] sm:$0x1]
    %v84 = vlaneseq
    %v85 = vshrl.u32 %v84, 7
    %v86 = vsub.s32 0, %v85
    %v87 = vrot.slane %v82, %v86
    %v105 = vunpack.c.l.b16 %v66
    %v106 = vunpack.c.l.b16 %v67
    %v107 = vunpack.c.l.b16 %v68
    %v108 = vunpack.c.l.b16 %v69
    %v109 = vunpack.c.l.b16 %v70
    %v110 = vunpack.c.l.b16 %v71
    %v111 = vunpack.c.l.b16 %v72
    %v112 = vunpack.c.l.b16 %v73
    %v113 = vunpack.c.l.b16 %v74
    %v114 = vunpack.c.l.b16 %v75
    %v115 = vunpack.c.l.b16 %v76
    %v116 = vunpack.c.l.b16 %v77
    %v117 = vunpack.c.l.b16 %v78
    %v118 = vunpack.c.l.b16 %v79
    %v119 = vunpack.c.l.b16 %v80
    %v120 = vunpack.c.l.b16 %v81
    %v121 = vpack.c.b16 %v106, %v105
    %v122 = vpack.c.b16 %v108, %v107
    %v123 = vpack.c.b16 %v110, %v109
    %v124 = vpack.c.b16 %v112, %v111
    %v125 = vpack.c.b16 %v114, %v113
    %v126 = vpack.c.b16 %v116, %v115
    %v127 = vpack.c.b16 %v118, %v117
    %v128 = vpack.c.b16 %v120, %v119
    %137 = vmatprep.subr.bf16.mxu0 0
    %138 = vmatpush1.bf16.msra.mxu0 %v121
    %139 = vmatprep.subr.bf16.mxu0 0
    %140 = vmatpush1.bf16.msra.mxu0 %v122
    %141 = vmatprep.subr.bf16.mxu0 0
    %142 = vmatpush1.bf16.msra.mxu0 %v123
    %143 = vmatprep.subr.bf16.mxu0 0
    %144 = vmatpush1.bf16.msra.mxu0 %v124
    %145 = vmatprep.subr.bf16.mxu0 0
    %146 = vmatpush1.bf16.msra.mxu0 %v125
    %147 = vmatprep.subr.bf16.mxu0 0
    %148 = vmatpush1.bf16.msra.mxu0 %v126
    %149 = vmatprep.subr.bf16.mxu0 0
    %150 = vmatpush1.bf16.msra.mxu0 %v127
    %151 = vmatprep.subr.bf16.mxu0 0
    %152 = vmatpush1.bf16.msra.mxu0 %v128
    %153 = vmatprep.subr.bf16.mxu0 0
    %154 = vmatpush1.bf16.msra.mxu0 0
    %155 = vmatprep.subr.bf16.mxu0 0
    %156 = vmatpush1.bf16.msra.mxu0 0
    %157 = vmatprep.subr.bf16.mxu0 0
    %158 = vmatpush1.bf16.msra.mxu0 0
    %159 = vmatprep.subr.bf16.mxu0 0
    %160 = vmatpush1.bf16.msra.mxu0 0
    %161 = vmatprep.subr.bf16.mxu0 0
    %162 = vmatpush1.bf16.msra.mxu0 0
    %163 = vmatprep.subr.bf16.mxu0 0
    %164 = vmatpush1.bf16.msra.mxu0 0
    %165 = vmatprep.subr.bf16.mxu0 0
    %166 = vmatpush1.bf16.msra.mxu0 0
    %167 = vmatprep.subr.bf16.mxu0 0
    %168 = vmatpush1.bf16.msra.mxu0 0
    %169 = vmatprep.mubr.bf16.mxu0 0
    %170 = vmatmul.mubr.bf16.gmra.mrb[0].mxu0 %v65
    %v171 = vpop.f32.mrb[0].mxu0
    %v172 = vadd.f32 %v87, %v171
    %v173 = vpop.f32.mrb[0].mxu0
    %v174 = vpop.f32.mrb[0].mxu0
    %v175 = vadd.f32 %v87, %v174
    %v176 = vpop.f32.mrb[0].mxu0
    %177 = vdwg.mxu0
    %v178 = vmax.f32 %v172, 0.0
    %v179 = vmax.f32 %v175, 0.0
    %v180 = vpack.c.bf16 %v179, %v178
    %v181 = vld [vmem:[#allocation7] sm:$0xf]
    %v182 = vld [vmem:[#allocation7 + $0x4] sm:$0xf]
    %v183 = vld [vmem:[#allocation7 + $0x8] sm:$0xf]
    %v184 = vld [vmem:[#allocation7 + $0xc] sm:$0xf]
    %v185 = vld [vmem:[#allocation7 + $0x10] sm:$0xf]
    %v186 = vld [vmem:[#allocation7 + $0x14] sm:$0xf]
    %v187 = vld [vmem:[#allocation7 + $0x18] sm:$0xf]
    %v188 = vld [vmem:[#allocation7 + $0x1c] sm:$0xf]
    %v189 = vld [vmem:[#allocation7 + $0x20] sm:$0xf]
    %v190 = vld [vmem:[#allocation7 + $0x24] sm:$0xf]
    %v191 = vld [vmem:[#allocation7 + $0x28] sm:$0xf]
    %v192 = vld [vmem:[#allocation7 + $0x2c] sm:$0xf]
    %v193 = vld [vmem:[#allocation7 + $0x30] sm:$0xf]
    %v194 = vld [vmem:[#allocation7 + $0x34] sm:$0xf]
    %v195 = vld [vmem:[#allocation7 + $0x38] sm:$0xf]
    %v196 = vld [vmem:[#allocation7 + $0x3c] sm:$0xf]
    %v197 = vld [vmem:[%s4] sm:$0x1]
    %v199 = vlaneseq
    %v200 = vshrl.u32 %v199, 7
    %v201 = vsub.s32 0, %v200
    %v202 = vrot.slane %v197, %v201
    %v220 = vunpack.c.l.b16 %v181
    %v221 = vunpack.c.l.b16 %v182
    %v222 = vunpack.c.l.b16 %v183
    %v223 = vunpack.c.l.b16 %v184
    %v224 = vunpack.c.l.b16 %v185
    %v225 = vunpack.c.l.b16 %v186
    %v226 = vunpack.c.l.b16 %v187
    %v227 = vunpack.c.l.b16 %v188
    %v228 = vunpack.c.l.b16 %v189
    %v229 = vunpack.c.l.b16 %v190
    %v230 = vunpack.c.l.b16 %v191
    %v231 = vunpack.c.l.b16 %v192
    %v232 = vunpack.c.l.b16 %v193
    %v233 = vunpack.c.l.b16 %v194
    %v234 = vunpack.c.l.b16 %v195
    %v235 = vunpack.c.l.b16 %v196
    %v236 = vpack.c.b16 %v221, %v220
    %v237 = vpack.c.b16 %v223, %v222
    %v238 = vpack.c.b16 %v225, %v224
    %v239 = vpack.c.b16 %v227, %v226
    %v240 = vpack.c.b16 %v229, %v228
    %v241 = vpack.c.b16 %v231, %v230
    %v242 = vpack.c.b16 %v233, %v232
    %v243 = vpack.c.b16 %v235, %v234
    %252 = vmatprep.subr.bf16.mxu0 0
    %253 = vmatpush1.bf16.msra.mxu0 %v236
    %254 = vmatprep.subr.bf16.mxu0 0
    %255 = vmatpush1.bf16.msra.mxu0 %v237
    %256 = vmatprep.subr.bf16.mxu0 0
    %257 = vmatpush1.bf16.msra.mxu0 %v238
    %258 = vmatprep.subr.bf16.mxu0 0
    %259 = vmatpush1.bf16.msra.mxu0 %v239
    %260 = vmatprep.subr.bf16.mxu0 0
    %261 = vmatpush1.bf16.msra.mxu0 %v240
    %262 = vmatprep.subr.bf16.mxu0 0
    %263 = vmatpush1.bf16.msra.mxu0 %v241
    %264 = vmatprep.subr.bf16.mxu0 0
    %265 = vmatpush1.bf16.msra.mxu0 %v242
    %266 = vmatprep.subr.bf16.mxu0 0
    %267 = vmatpush1.bf16.msra.mxu0 %v243
    %268 = vmatprep.subr.bf16.mxu0 0
    %269 = vmatpush1.bf16.msra.mxu0 0
    %270 = vmatprep.subr.bf16.mxu0 0
    %271 = vmatpush1.bf16.msra.mxu0 0
    %272 = vmatprep.subr.bf16.mxu0 0
    %273 = vmatpush1.bf16.msra.mxu0 0
    %274 = vmatprep.subr.bf16.mxu0 0
    %275 = vmatpush1.bf16.msra.mxu0 0
    %276 = vmatprep.subr.bf16.mxu0 0
    %277 = vmatpush1.bf16.msra.mxu0 0
    %278 = vmatprep.subr.bf16.mxu0 0
    %279 = vmatpush1.bf16.msra.mxu0 0
    %280 = vmatprep.subr.bf16.mxu0 0
    %281 = vmatpush1.bf16.msra.mxu0 0
    %282 = vmatprep.subr.bf16.mxu0 0
    %283 = vmatpush1.bf16.msra.mxu0 0
    %284 = vmatprep.mubr.bf16.mxu0 0
    %285 = vmatmul.mubr.bf16.gmra.mrb[0].mxu0 %v180
    %v286 = vpop.f32.mrb[0].mxu0
    %v287 = vadd.f32 %v202, %v286
    %v288 = vpop.f32.mrb[0].mxu0
    %v289 = vpop.f32.mrb[0].mxu0
    %v290 = vadd.f32 %v202, %v289
    %v291 = vpop.f32.mrb[0].mxu0
    %292 = vdwg.mxu0
    %293 = vst [vmem:[#allocation8] sm:$0xff] %v287
    %294 = vst [vmem:[#allocation8 + $0x8] sm:$0xff] %v290
    // Predicated region
    $region34: #{tpu_custom_call.1} parent=1 // pred_check
      _
    $region35: #{tpu_custom_call.1} parent=1 // pred_check_branch
      %296 = sbr.rel (0) target = $region37
    $region36: #{tpu_custom_call.1} parent=1 // pred_region
      %s298 = ssub.s32 256, 256
      %299 = vsyncadd [#allocation4], %s298
      %s300 = sshll.u32 [#allocation8], 4
      %s301 = int_to_ptr.vmem [resolvable:$true] %s300
      %306 = dma.vmem_to_hbm [thread:$0]  %s301, 256, %s5, [#allocation4], 128, 128, 8
    $region37: #{tpu_custom_call.1} parent=1 // pred_fallthru
      _
    // Predicated region
    $region38: #{tpu_custom_call.1} parent=1 // pred_check
      _
    $region39: #{tpu_custom_call.1} parent=1 // pred_check_branch
      %308 = sbr.rel (0) target = $region41
    $region40: #{tpu_custom_call.1} parent=1 // pred_region
      %309 = dma.done [#allocation4], 256
    $region41: #{tpu_custom_call.1} parent=1 // pred_fallthru
      _
    %310 = vsyncpa [#allocation3], 1
    %311 = vsyncpa [#allocation6], 1
    %312 = vsyncpa [#allocation4], 1

</llo_original>
